<compile_context>
chip_gen: v7x
topology: tpu7x:2x2x1
jax: 0.10.0
libtpu: 0.0.40
codegen_flags: <defaults>
</compile_context>

<pallas_src>
import functools

import jax
import jax.numpy as jnp
import numpy as np
from jax import lax
from jax.experimental import pallas as pl
from jax.experimental.pallas import tpu as pltpu


# ----------------------------------------------------------------------------- kernels
def _proj_accum_kernel(x_ref, wsp_ref, bsp_ref, cross_ref, psum_ref, *,
                       S, L, TL, n_lt, need_mask, compute_dtype):
    """Stacked conv_state/conv_proj over one (C, TL) tile; accumulate
    [x_state @ x_proj^T ; Gram(x_proj)] (S+K, K) and rowsum(x_proj) (K, 1)."""
    p = pl.program_id(1)
    lt = pl.program_id(2)

    @pl.when(lt == 0)
    def _():
        cross_ref[...] = jnp.zeros_like(cross_ref)
        psum_ref[...] = jnp.zeros_like(psum_ref)

    x = x_ref[0].astype(compute_dtype)                                    # (C, TL)
    sp = jnp.dot(wsp_ref[...], x, preferred_element_type=jnp.float32)     # (S+K, TL)
    sp = sp + bsp_ref[...]

    if need_mask:
        # Only the last *global* L tile can reach past the true L (Pallas pads
        # the trailing block: padded x lanes are undefined and the bias would
        # pollute the sums).  Interior tiles skip the iota/compare/select.
        is_last = jnp.logical_and(p == pl.num_programs(1) - 1,
                                  lt == pl.num_programs(2) - 1)
        off = (p * n_lt + lt) * TL

        def _mask(v):
            col = lax.broadcasted_iota(jnp.int32, v.shape, 1) + off
            return jnp.where(col < L, v, 0.0)

        sp = lax.cond(is_last, _mask, lambda v: v, sp)

    # rowsum(x_proj) in f32 (VPU/XLU reduction; feeds the BN mean).
    psum_ref[0, 0] += jnp.sum(sp[S:], axis=-1, keepdims=True)             # (K, 1)
    # rows [0:S] -> x_state @ x_proj^T, rows [S:] -> Gram(x_proj).
    # Cast back to compute_dtype so bf16 configs stay on the bf16 MXU path.
    sp_c = sp.astype(compute_dtype)
    cross_ref[0, 0] += lax.dot_general(
        sp_c, sp_c[S:], dimension_numbers=(((1,), (1,)), ((), ())),
        preferred_element_type=jnp.float32)                               # (S+K, K)


def _extend_bn_res_kernel(x_ref, m_ref, wp_ref, bp_ref, sc_ref, sh_ref, o_ref, *,
                          compute_dtype):
    """Per (C, TL) tile: recompute x_proj, y = M @ x_proj, fused BN affine +
    residual add; store in o_ref.dtype (x.dtype by default, not f32)."""
    # TODO(synk): if a production config makes this kernel MXU-bound (large K),
    # write x_proj out of kernel A and read it here instead of recomputing.
    x = x_ref[0]                                                          # (C, TL)
    xc = x.astype(compute_dtype)
    xp = jnp.dot(wp_ref[...], xc, preferred_element_type=jnp.float32) + bp_ref[...]
    y = jnp.dot(m_ref[0], xp.astype(compute_dtype),
                preferred_element_type=jnp.float32)                       # (C, TL)
    out = x.astype(jnp.float32) + y * sc_ref[...] + sh_ref[...]
    o_ref[0] = out.astype(o_ref.dtype)


# ----------------------------------------------------------------------------- tiling
def _round_up(v, m):
    return -(-v // m) * m


def _pick_l_tile(L, C, in_bytes, out_bytes, tile_budget_bytes=16 << 20):
    """Largest 128-multiple divisor of Lpad (capped at 2048) whose double-buffered
    x + out kernel-C tiles fit the VMEM tile budget (v7x 64 MiB-safe default)."""
    Lpad = _round_up(L, 128)
    per_lane = max(1, 2 * C * (in_bytes + out_bytes))
    cap = min(2048, max(128, (tile_budget_bytes // per_lane) // 128 * 128))
    m = Lpad // 128
    best = 1
    for d in range(1, m + 1):
        if m % d == 0 and d * 128 <= cap:
            best = d
    return Lpad, best * 128


def _vmem_limit(need_bytes):
    # Generous headroom, raised past v5e's 16 MiB scoped default, kept well under
    # v7x's 64 MiB physical VMEM.
    return int(min(max(need_bytes + (16 << 20), 32 << 20), 60 << 20))


# ----------------------------------------------------------------------------- wrapper
@functools.partial(jax.jit,
                   static_argnames=("normalize", "eps", "compute_dtype", "out_dtype"))
def glore_unit_pallas(x, params, normalize=False, eps=1e-4,
                      compute_dtype=jnp.float32, out_dtype=None):
    # compute_dtype=jnp.bfloat16 halves matmul-operand VMEM / traffic and hits the
    # bf16 MXU on v6e/v7x; all accumulation stays f32 via preferred_element_type.
    N, C, H, W = x.shape
    L = H * W
    S = params["ws"].shape[0]            # num_s = 2 * num_mid
    K = params["wp"].shape[0]            # num_n = num_mid
    out_dt = x.dtype if out_dtype is None else jnp.dtype(out_dtype)
    in_bytes = np.dtype(x.dtype).itemsize
    out_bytes = np.dtype(out_dt).itemsize
    cd_bytes = np.dtype(compute_dtype).itemsize

    Lpad, TL = _pick_l_tile(L, C, in_bytes, out_bytes)
    nL = Lpad // TL
    # Feed both v7x TensorCores when N alone cannot: split the L reduction into
    # P parallel partial accumulators (summed below).  No-op on single-TC chips.
    P = 2 if (N % 2 == 1 and nL >= 2 and nL % 2 == 0) else 1
    nLP = nL // P
    need_mask = (L % TL) != 0
    scale = (1.0 / L) if normalize else 1.0

    xf = x.reshape(N, C, L)              # no pad / astype: tiles are cast in-kernel

    # Stack conv_state / conv_proj into one MXU pass per activation tile.
    wsp = jnp.concatenate([params["ws"], params["wp"]], axis=0).astype(compute_dtype)
    bsp = jnp.concatenate([params["bs"], params["bp"]], axis=0).reshape(S + K, 1)
    wp = params["wp"].astype(compute_dtype)                               # (K, C)
    bp = params["bp"].reshape(K, 1)

    # --- kernel A: projection + x_n_state / Gram / rowsum accumulation ---------
    vmem_a = _vmem_limit(2 * C * TL * in_bytes + (S + K) * (C * cd_bytes + 4)
                         + 2 * ((S + K) * K + K) * 4)
    cross, psum = pl.pallas_call(
        functools.partial(_proj_accum_kernel, S=S, L=L, TL=TL, n_lt=nLP,
                          need_mask=need_mask, compute_dtype=compute_dtype),
        out_shape=(jax.ShapeDtypeStruct((N, P, S + K, K), jnp.float32),
                   jax.ShapeDtypeStruct((N, P, K, 1), jnp.float32)),
        grid=(N, P, nLP),
        in_specs=[
            pl.BlockSpec((1, C, TL), lambda b, p, lt: (b, 0, p * nLP + lt)),
            pl.BlockSpec((S + K, C), lambda b, p, lt: (0, 0)),
            pl.BlockSpec((S + K, 1), lambda b, p, lt: (0, 0)),
        ],
        out_specs=(pl.BlockSpec((1, 1, S + K, K), lambda b, p, lt: (b, p, 0, 0)),
                   pl.BlockSpec((1, 1, K, 1), lambda b, p, lt: (b, p, 0, 0))),
        compiler_params=pltpu.CompilerParams(
            dimension_semantics=("parallel", "parallel", "arbitrary"),
            vmem_limit_bytes=vmem_a),
    )(xf, wsp, bsp)

    # --- tiny per-batch GCN + back-projection matrix M + BN batch statistics ---
    # O(C*S*K) work: a dedicated pallas_call (former kernel B) was pure launch +
    # HBM-roundtrip overhead, so this runs as plain XLA ops on the tiny tensors.
    cross = jnp.sum(cross, axis=1)                                        # (N, S+K, K)
    psum = jnp.sum(psum, axis=1)[..., 0]                                  # (N, K)
    xns = cross[:, :S] * scale                                            # (N, S, K)
    gram = cross[:, S:]                                                   # (N, K, K)

    h = jnp.einsum("nsk,jk->nsj", xns, params["w1"]) + params["b1"][None, None, :]
    h = jnp.maximum(h + xns, 0.0)                                         # residual + ReLU
    h2 = jnp.einsum("ab,nbk->nak", params["w2"], h)                       # (N, S, K)
    m = jnp.einsum("cs,nsk->nck", params["we"], h2)                       # (N, C, K)

    # Reassociated back-projection y = M @ x_proj  =>  analytic batch statistics:
    #   Sum_l y = M @ rowsum(x_proj),   Sum_l y^2 = diag(M @ Gram @ M^T)
    sumy = jnp.einsum("nck,nk->nc", m, psum)                              # (N, C)
    mg = jnp.einsum("nck,nkj->ncj", m, gram)                              # (N, C, K)
    sumsq = jnp.sum(mg * m, axis=-1)                                      # (N, C)

    cnt = jnp.float32(N * L)
    mean = jnp.sum(sumy, axis=0) / cnt                                    # (C,)
    var = jnp.maximum(jnp.sum(sumsq, axis=0) / cnt - mean * mean, 0.0)    # biased var
    inv = lax.rsqrt(var + eps)
    gsc = params["gamma"] * inv
    sc = gsc.reshape(C, 1).astype(jnp.float32)                            # (C, 1)
    sh = (params["beta"] - mean * gsc).reshape(C, 1).astype(jnp.float32)  # (C, 1)
    m_cd = m.astype(compute_dtype)

    # --- kernel C: back-projection + fused BN affine + residual -----------------
    vmem_c = _vmem_limit(2 * C * TL * (in_bytes + out_bytes)
                         + (2 * C * K + K * C) * cd_bytes + (K + 2 * C) * 4)
    out = pl.pallas_call(
        functools.partial(_extend_bn_res_kernel, compute_dtype=compute_dtype),
        out_shape=jax.ShapeDtypeStruct((N, C, L), out_dt),
        grid=(N, nL),
        in_specs=[
            pl.BlockSpec((1, C, TL), lambda b, l: (b, 0, l)),
            pl.BlockSpec((1, C, K), lambda b, l: (b, 0, 0)),
            pl.BlockSpec((K, C), lambda b, l: (0, 0)),
            pl.BlockSpec((K, 1), lambda b, l: (0, 0)),
            pl.BlockSpec((C, 1), lambda b, l: (0, 0)),
            pl.BlockSpec((C, 1), lambda b, l: (0, 0)),
        ],
        out_specs=pl.BlockSpec((1, C, TL), lambda b, l: (b, 0, l)),
        compiler_params=pltpu.CompilerParams(
            dimension_semantics=("parallel", "parallel"),
            vmem_limit_bytes=vmem_c),
        # TODO(synk): if profiling shows exposed DMA here, add
        # pipeline_mode=pl.Buffered(3) on the x/out BlockSpecs (sweep 2 vs 3).
    )(xf, m_cd, wp, bp, sc, sh)

    return out.reshape(N, C, H, W)


# ----------------------------------------------------------------------------- reference
def glore_unit_ref(x, p, normalize=False, eps=1e-4):
    N, C, H, W = x.shape
    L = H * W
    xf = x.reshape(N, C, L).astype(jnp.float32)
    xs = jnp.einsum("sc,ncl->nsl", p["ws"], xf) + p["bs"][None, :, None]
    xp = jnp.einsum("kc,ncl->nkl", p["wp"], xf) + p["bp"][None, :, None]
    xns = jnp.einsum("nsl,nkl->nsk", xs, xp)
    if normalize:
        xns = xns * (1.0 / L)
    h = jnp.einsum("nsk,jk->nsj", xns, p["w1"]) + p["b1"][None, None, :]
    h = jnp.maximum(h + xns, 0.0)
    h2 = jnp.einsum("ab,nbk->nak", p["w2"], h)
    xsr = jnp.einsum("nsk,nkl->nsl", h2, xp)
    y = jnp.einsum("cs,nsl->ncl", p["we"], xsr)
    mean = y.mean(axis=(0, 2), keepdims=True)
    var = ((y - mean) ** 2).mean(axis=(0, 2), keepdims=True)
    yb = ((y - mean) / jnp.sqrt(var + eps) * p["gamma"][None, :, None]
          + p["beta"][None, :, None])
    return (xf + yb).reshape(N, C, H, W)


# ----------------------------------------------------------------------------- params
def init_params(key, num_in, num_mid):
    num_s, num_n = 2 * num_mid, num_mid
    ks = jax.random.split(key, 10)

    def w(k, shape, fan_in):
        return jax.random.normal(k, shape, jnp.float32) / jnp.sqrt(float(fan_in))

    return dict(
        ws=w(ks[0], (num_s, num_in), num_in),              # conv_state weight
        bs=0.1 * jax.random.normal(ks[1], (num_s,), jnp.float32),
        wp=w(ks[2], (num_n, num_in), num_in),              # conv_proj weight
        bp=0.1 * jax.random.normal(ks[3], (num_n,), jnp.float32),
        w1=w(ks[4], (num_n, num_n), num_n),                # gcn.conv1 weight
        b1=0.1 * jax.random.normal(ks[5], (num_n,), jnp.float32),
        w2=w(ks[6], (num_s, num_s), num_s),                # gcn.conv2 weight (no bias)
        we=w(ks[7], (num_in, num_s), num_s),               # conv_extend weight (no bias)
        gamma=1.0 + 0.1 * jax.random.normal(ks[8], (num_in,), jnp.float32),
        beta=0.1 * jax.random.normal(ks[9], (num_in,), jnp.float32),
    )


# ----------------------------------------------------------------------------- main
if __name__ == "__main__":
    key = jax.random.PRNGKey(0)
    kx, kp = jax.random.split(key)

    num_in, num_mid = 16, 8            # num_s = 16, num_n = 8
    N, H, W = 2, 16, 16
    x = jax.random.normal(kx, (N, num_in, H, W), jnp.float32)
    params = init_params(kp, num_in, num_mid)

    out = glore_unit_pallas(x, params)
    out = jax.block_until_ready(out)

    ref = glore_unit_ref(x, params)
    rel_err = float(jnp.max(jnp.abs(out.astype(jnp.float32) - ref))
                    / (jnp.max(jnp.abs(ref)) + 1e-6))
    assert out.shape == x.shape and rel_err < 1e-2, f"mismatch rel_err={rel_err}"
    print("KERNEL_OK")
</pallas_src>

<mosaic_0001>
module attributes {stable_mosaic.version = 11 : i64} {
  func.func @_proj_accum_kernel(%arg0: i32, %arg1: i32, %arg2: i32, %arg3: memref<1x16x256xf32, #tpu.memory_space<vmem>>, %arg4: memref<24x16xf32, #tpu.memory_space<vmem>>, %arg5: memref<24x1xf32, #tpu.memory_space<vmem>>, %arg6: memref<1x1x24x8xf32, #tpu.memory_space<vmem>>, %arg7: memref<1x1x8x1xf32, #tpu.memory_space<vmem>>) attributes {dimension_semantics = [#tpu.dimension_semantics<parallel>, #tpu.dimension_semantics<parallel>, #tpu.dimension_semantics<arbitrary>], iteration_bounds = array<i64: 2, 1, 1>, scalar_prefetch = 0 : i64, scratch_operands = 0 : i64, tpu.core_type = #tpu.core_type<tc>, window_params = [{transform_indices = @transform_0, window_bounds = array<i64: 1, 16, 256>}, {pipeline_mode = #tpu.pipeline_mode<synchronous>, transform_indices = @transform_1, window_bounds = array<i64: 24, 16>}, {pipeline_mode = #tpu.pipeline_mode<synchronous>, transform_indices = @transform_2, window_bounds = array<i64: 24, 1>}, {transform_indices = @transform_3, window_bounds = array<i64: 1, 1, 24, 8>}, {transform_indices = @transform_4, window_bounds = array<i64: 1, 1, 8, 1>}]} {
    %c0_i32 = arith.constant 0 : i32
    %0 = arith.cmpi eq, %arg2, %c0_i32 : i32
    %1 = arith.extui %0 : i1 to i32
    %c0_i32_0 = arith.constant 0 : i32
    %2 = arith.cmpi ne, %1, %c0_i32_0 : i32
    scf.if %2 {
      %cst_25 = arith.constant 0.000000e+00 : f32
      %27 = vector.broadcast %cst_25 : f32 to vector<1x1x24x8xf32>
      %c0_26 = arith.constant 0 : index
      %c0_27 = arith.constant 0 : index
      %c0_28 = arith.constant 0 : index
      %c0_29 = arith.constant 0 : index
      %28 = vector.load %arg6[%c0_26, %c0_27, %c0_28, %c0_29] : memref<1x1x24x8xf32, #tpu.memory_space<vmem>>, vector<1x1x24x8xf32>
      tpu.vector_store %arg6[%c0_26, %c0_27, %c0_28, %c0_29], %27 {strides = array<i32>} : memref<1x1x24x8xf32, #tpu.memory_space<vmem>>, vector<1x1x24x8xf32>,
      %cst_30 = arith.constant 0.000000e+00 : f32
      %29 = vector.broadcast %cst_30 : f32 to vector<1x1x8x1xf32>
      %c0_31 = arith.constant 0 : index
      %c0_32 = arith.constant 0 : index
      %c0_33 = arith.constant 0 : index
      %c0_34 = arith.constant 0 : index
      %30 = vector.load %arg7[%c0_31, %c0_32, %c0_33, %c0_34] : memref<1x1x8x1xf32, #tpu.memory_space<vmem>>, vector<1x1x8x1xf32>
      tpu.vector_store %arg7[%c0_31, %c0_32, %c0_33, %c0_34], %29 {strides = array<i32>} : memref<1x1x8x1xf32, #tpu.memory_space<vmem>>, vector<1x1x8x1xf32>,
    } else {
    }
    %c0 = arith.constant 0 : index
    %c0_1 = arith.constant 0 : index
    %c0_2 = arith.constant 0 : index
    %3 = vector.load %arg3[%c0, %c0_1, %c0_2] : memref<1x16x256xf32, #tpu.memory_space<vmem>>, vector<1x16x256xf32>
    %4 = vector.shape_cast %3 : vector<1x16x256xf32> to vector<16x256xf32>
    %c0_3 = arith.constant 0 : index
    %c0_4 = arith.constant 0 : index
    %5 = vector.load %arg4[%c0_3, %c0_4] : memref<24x16xf32, #tpu.memory_space<vmem>>, vector<24x16xf32>
    %cst = arith.constant dense<0.000000e+00> : vector<24x256xf32>
    %6 = tpu.matmul %5, %4, %cst {dimension_numbers = #tpu.dot_dimension_numbers<[1], [0], [0], [1], [0, 0, 1, 1], [], []>} : vector<24x16xf32>, vector<16x256xf32>, vector<24x256xf32> -> vector<24x256xf32>
    %c0_5 = arith.constant 0 : index
    %c0_6 = arith.constant 0 : index
    %7 = vector.load %arg5[%c0_5, %c0_6] : memref<24x1xf32, #tpu.memory_space<vmem>>, vector<24x1xf32>
    %8 = vector.broadcast %7 : vector<24x1xf32> to vector<24x256xf32>
    %9 = arith.addf %6, %8 : vector<24x256xf32>
    %c0_7 = arith.constant 0 : index
    %c0_8 = arith.constant 0 : index
    %c0_9 = arith.constant 0 : index
    %c0_10 = arith.constant 0 : index
    %10 = vector.load %arg7[%c0_7, %c0_8, %c0_9, %c0_10] : memref<1x1x8x1xf32, #tpu.memory_space<vmem>>, vector<1x1x8x1xf32>
    %11 = vector.shape_cast %10 : vector<1x1x8x1xf32> to vector<8x1xf32>
    %12 = vector.extract_strided_slice %9 {offsets = [16, 0], sizes = [8, 256], strides = [1, 1]} : vector<24x256xf32> to vector<8x256xf32>
    %cst_11 = arith.constant dense<0.000000e+00> : vector<8xf32>
    %13 = vector.multi_reduction <add>, %12, %cst_11 [1] : vector<8x256xf32> to vector<8xf32>
    %14 = vector.shape_cast %13 : vector<8xf32> to vector<8x1xf32>
    %15 = arith.addf %11, %14 : vector<8x1xf32>
    %c0_12 = arith.constant 0 : index
    %c0_13 = arith.constant 0 : index
    %c0_14 = arith.constant 0 : index
    %c0_15 = arith.constant 0 : index
    %16 = vector.load %arg7[%c0_12, %c0_13, %c0_14, %c0_15] : memref<1x1x8x1xf32, #tpu.memory_space<vmem>>, vector<1x1x8x1xf32>
    %17 = vector.shape_cast %16 : vector<1x1x8x1xf32> to vector<8x1xf32>
    %18 = vector.shape_cast %15 : vector<8x1xf32> to vector<1x1x8x1xf32>
    tpu.vector_store %arg7[%c0_12, %c0_13, %c0_14, %c0_15], %18 {strides = array<i32>} : memref<1x1x8x1xf32, #tpu.memory_space<vmem>>, vector<1x1x8x1xf32>,
    %c0_16 = arith.constant 0 : index
    %c0_17 = arith.constant 0 : index
    %c0_18 = arith.constant 0 : index
    %c0_19 = arith.constant 0 : index
    %19 = vector.load %arg6[%c0_16, %c0_17, %c0_18, %c0_19] : memref<1x1x24x8xf32, #tpu.memory_space<vmem>>, vector<1x1x24x8xf32>
    %20 = vector.shape_cast %19 : vector<1x1x24x8xf32> to vector<24x8xf32>
    %21 = vector.extract_strided_slice %9 {offsets = [16, 0], sizes = [8, 256], strides = [1, 1]} : vector<24x256xf32> to vector<8x256xf32>
    %cst_20 = arith.constant dense<0.000000e+00> : vector<24x8xf32>
    %22 = tpu.matmul %9, %21, %cst_20 {dimension_numbers = #tpu.dot_dimension_numbers<[1], [1], [0], [0], [0, 0, 1, 0], [], []>} : vector<24x256xf32>, vector<8x256xf32>, vector<24x8xf32> -> vector<24x8xf32>
    %23 = arith.addf %20, %22 : vector<24x8xf32>
    %c0_21 = arith.constant 0 : index
    %c0_22 = arith.constant 0 : index
    %c0_23 = arith.constant 0 : index
    %c0_24 = arith.constant 0 : index
    %24 = vector.load %arg6[%c0_21, %c0_22, %c0_23, %c0_24] : memref<1x1x24x8xf32, #tpu.memory_space<vmem>>, vector<1x1x24x8xf32>
    %25 = vector.shape_cast %24 : vector<1x1x24x8xf32> to vector<24x8xf32>
    %26 = vector.shape_cast %23 : vector<24x8xf32> to vector<1x1x24x8xf32>
    tpu.vector_store %arg6[%c0_21, %c0_22, %c0_23, %c0_24], %26 {strides = array<i32>} : memref<1x1x24x8xf32, #tpu.memory_space<vmem>>, vector<1x1x24x8xf32>,
    return
  }
  func.func @transform_0(%arg0: i32, %arg1: i32, %arg2: i32) -> (i32, i32, i32) {
    %c1_i32 = arith.constant 1 : i32
    %0 = arith.muli %arg1, %c1_i32 : i32
    %1 = arith.addi %0, %arg2 : i32
    %c0_i32 = arith.constant 0 : i32
    %c0_i32_0 = arith.constant 0 : i32
    return %arg0, %c0_i32, %1 : i32, i32, i32
  }
  func.func @transform_1(%arg0: i32, %arg1: i32, %arg2: i32) -> (i32, i32) {
    %c0_i32 = arith.constant 0 : i32
    %c0_i32_0 = arith.constant 0 : i32
    %c0_i32_1 = arith.constant 0 : i32
    return %c0_i32, %c0_i32_0 : i32, i32
  }
  func.func @transform_2(%arg0: i32, %arg1: i32, %arg2: i32) -> (i32, i32) {
    %c0_i32 = arith.constant 0 : i32
    %c0_i32_0 = arith.constant 0 : i32
    %c0_i32_1 = arith.constant 0 : i32
    return %c0_i32, %c0_i32_0 : i32, i32
  }
  func.func @transform_3(%arg0: i32, %arg1: i32, %arg2: i32) -> (i32, i32, i32, i32) {
    %c0_i32 = arith.constant 0 : i32
    %c0_i32_0 = arith.constant 0 : i32
    %c0_i32_1 = arith.constant 0 : i32
    return %arg0, %arg1, %c0_i32, %c0_i32_0 : i32, i32, i32, i32
  }
  func.func @transform_4(%arg0: i32, %arg1: i32, %arg2: i32) -> (i32, i32, i32, i32) {
    %c0_i32 = arith.constant 0 : i32
    %c0_i32_0 = arith.constant 0 : i32
    %c0_i32_1 = arith.constant 0 : i32
    return %arg0, %arg1, %c0_i32, %c0_i32_0 : i32, i32, i32, i32
  }
}

module attributes {stable_mosaic.version = 11 : i64} {
  func.func @_extend_bn_res_kernel(%arg0: i32, %arg1: i32, %arg2: memref<1x16x256xf32, #tpu.memory_space<vmem>>, %arg3: memref<1x16x8xf32, #tpu.memory_space<vmem>>, %arg4: memref<8x16xf32, #tpu.memory_space<vmem>>, %arg5: memref<8x1xf32, #tpu.memory_space<vmem>>, %arg6: memref<16x1xf32, #tpu.memory_space<vmem>>, %arg7: memref<16x1xf32, #tpu.memory_space<vmem>>, %arg8: memref<1x16x256xf32, #tpu.memory_space<vmem>>) attributes {dimension_semantics = [#tpu.dimension_semantics<parallel>, #tpu.dimension_semantics<parallel>], iteration_bounds = array<i64: 2, 1>, scalar_prefetch = 0 : i64, scratch_operands = 0 : i64, tpu.core_type = #tpu.core_type<tc>, window_params = [{transform_indices = @transform_0, window_bounds = array<i64: 1, 16, 256>}, {transform_indices = @transform_1, window_bounds = array<i64: 1, 16, 8>}, {pipeline_mode = #tpu.pipeline_mode<synchronous>, transform_indices = @transform_2, window_bounds = array<i64: 8, 16>}, {pipeline_mode = #tpu.pipeline_mode<synchronous>, transform_indices = @transform_3, window_bounds = array<i64: 8, 1>}, {pipeline_mode = #tpu.pipeline_mode<synchronous>, transform_indices = @transform_4, window_bounds = array<i64: 16, 1>}, {pipeline_mode = #tpu.pipeline_mode<synchronous>, transform_indices = @transform_5, window_bounds = array<i64: 16, 1>}, {transform_indices = @transform_6, window_bounds = array<i64: 1, 16, 256>}]} {
    %c0 = arith.constant 0 : index
    %c0_0 = arith.constant 0 : index
    %c0_1 = arith.constant 0 : index
    %0 = vector.load %arg2[%c0, %c0_0, %c0_1] : memref<1x16x256xf32, #tpu.memory_space<vmem>>, vector<1x16x256xf32>
    %1 = vector.shape_cast %0 : vector<1x16x256xf32> to vector<16x256xf32>
    %c0_2 = arith.constant 0 : index
    %c0_3 = arith.constant 0 : index
    %2 = vector.load %arg4[%c0_2, %c0_3] : memref<8x16xf32, #tpu.memory_space<vmem>>, vector<8x16xf32>
    %cst = arith.constant dense<0.000000e+00> : vector<8x256xf32>
    %3 = tpu.matmul %2, %1, %cst {dimension_numbers = #tpu.dot_dimension_numbers<[1], [0], [0], [1], [0, 0, 1, 1], [], []>} : vector<8x16xf32>, vector<16x256xf32>, vector<8x256xf32> -> vector<8x256xf32>
    %c0_4 = arith.constant 0 : index
    %c0_5 = arith.constant 0 : index
    %4 = vector.load %arg5[%c0_4, %c0_5] : memref<8x1xf32, #tpu.memory_space<vmem>>, vector<8x1xf32>
    %5 = vector.broadcast %4 : vector<8x1xf32> to vector<8x256xf32>
    %6 = arith.addf %3, %5 : vector<8x256xf32>
    %c0_6 = arith.constant 0 : index
    %c0_7 = arith.constant 0 : index
    %c0_8 = arith.constant 0 : index
    %7 = vector.load %arg3[%c0_6, %c0_7, %c0_8] : memref<1x16x8xf32, #tpu.memory_space<vmem>>, vector<1x16x8xf32>
    %8 = vector.shape_cast %7 : vector<1x16x8xf32> to vector<16x8xf32>
    %cst_9 = arith.constant dense<0.000000e+00> : vector<16x256xf32>
    %9 = tpu.matmul %8, %6, %cst_9 {dimension_numbers = #tpu.dot_dimension_numbers<[1], [0], [0], [1], [0, 0, 1, 1], [], []>} : vector<16x8xf32>, vector<8x256xf32>, vector<16x256xf32> -> vector<16x256xf32>
    %c0_10 = arith.constant 0 : index
    %c0_11 = arith.constant 0 : index
    %10 = vector.load %arg6[%c0_10, %c0_11] : memref<16x1xf32, #tpu.memory_space<vmem>>, vector<16x1xf32>
    %11 = vector.broadcast %10 : vector<16x1xf32> to vector<16x256xf32>
    %12 = arith.mulf %9, %11 : vector<16x256xf32>
    %13 = arith.addf %1, %12 : vector<16x256xf32>
    %c0_12 = arith.constant 0 : index
    %c0_13 = arith.constant 0 : index
    %14 = vector.load %arg7[%c0_12, %c0_13] : memref<16x1xf32, #tpu.memory_space<vmem>>, vector<16x1xf32>
    %15 = vector.broadcast %14 : vector<16x1xf32> to vector<16x256xf32>
    %16 = arith.addf %13, %15 : vector<16x256xf32>
    %c0_14 = arith.constant 0 : index
    %c0_15 = arith.constant 0 : index
    %c0_16 = arith.constant 0 : index
    %17 = vector.load %arg8[%c0_14, %c0_15, %c0_16] : memref<1x16x256xf32, #tpu.memory_space<vmem>>, vector<1x16x256xf32>
    %18 = vector.shape_cast %17 : vector<1x16x256xf32> to vector<16x256xf32>
    %19 = vector.shape_cast %16 : vector<16x256xf32> to vector<1x16x256xf32>
    tpu.vector_store %arg8[%c0_14, %c0_15, %c0_16], %19 {strides = array<i32>} : memref<1x16x256xf32, #tpu.memory_space<vmem>>, vector<1x16x256xf32>,
    return
  }
  func.func @transform_0(%arg0: i32, %arg1: i32) -> (i32, i32, i32) {
    %c0_i32 = arith.constant 0 : i32
    %c0_i32_0 = arith.constant 0 : i32
    return %arg0, %c0_i32, %arg1 : i32, i32, i32
  }
  func.func @transform_1(%arg0: i32, %arg1: i32) -> (i32, i32, i32) {
    %c0_i32 = arith.constant 0 : i32
    %c0_i32_0 = arith.constant 0 : i32
    %c0_i32_1 = arith.constant 0 : i32
    return %arg0, %c0_i32, %c0_i32_0 : i32, i32, i32
  }
  func.func @transform_2(%arg0: i32, %arg1: i32) -> (i32, i32) {
    %c0_i32 = arith.constant 0 : i32
    %c0_i32_0 = arith.constant 0 : i32
    %c0_i32_1 = arith.constant 0 : i32
    return %c0_i32, %c0_i32_0 : i32, i32
  }
  func.func @transform_3(%arg0: i32, %arg1: i32) -> (i32, i32) {
    %c0_i32 = arith.constant 0 : i32
    %c0_i32_0 = arith.constant 0 : i32
    %c0_i32_1 = arith.constant 0 : i32
    return %c0_i32, %c0_i32_0 : i32, i32
  }
  func.func @transform_4(%arg0: i32, %arg1: i32) -> (i32, i32) {
    %c0_i32 = arith.constant 0 : i32
    %c0_i32_0 = arith.constant 0 : i32
    %c0_i32_1 = arith.constant 0 : i32
    return %c0_i32, %c0_i32_0 : i32, i32
  }
  func.func @transform_5(%arg0: i32, %arg1: i32) -> (i32, i32) {
    %c0_i32 = arith.constant 0 : i32
    %c0_i32_0 = arith.constant 0 : i32
    %c0_i32_1 = arith.constant 0 : i32
    return %c0_i32, %c0_i32_0 : i32, i32
  }
  func.func @transform_6(%arg0: i32, %arg1: i32) -> (i32, i32, i32) {
    %c0_i32 = arith.constant 0 : i32
    %c0_i32_0 = arith.constant 0 : i32
    return %arg0, %c0_i32, %arg1 : i32, i32, i32
  }
}

</mosaic_0001>

<llo_original>
// kernel: glore_unit_pallas.2
$region0: #{glore_unit_pallas.2}
  #allocation0 [shape = 'u32[]', space=smem, size = 0x4, offset = 0x4, fixed_abs, tag = 'smem constant byte address 0x4 - core index']
  #allocation1 [shape = 'u32[144,128]{1,0:T(1,128)}', space=vmem, size = 0x12000, scoped, tag = 'internal scratch']
  %s0 = inlined_call_operand.vmem [shape: f32[2,16,256], index: 0, kind: input, shape index: {}]
  %s1 = inlined_call_operand.vmem [shape: f32[24,16], index: 1, kind: input, shape index: {}]
  %s2 = inlined_call_operand.vmem [shape: f32[24,1], index: 2, kind: input, shape index: {}]
  %s3 = inlined_call_operand.vmem [shape: f32[2,1,24,8], index: 3, kind: output, shape index: {0}]
  %s4 = inlined_call_operand.vmem [shape: f32[2,1,8,1], index: 4, kind: output, shape index: {1}]
  %5 = xla_tuple %s3, %s4
  %s6 = sld [smem:[#allocation0]]
  $region57: #{glore_unit_pallas.2} parent=0
    _
  %s8 = ssub.s32 1, %s6
  %s9 = scalar_select 0, %s8, %s6
  loop: start=0, step=1, limit=4
  $region2: #{glore_unit_pallas.2} parent=0 // loop_pre_header
    _
  $region3: #{glore_unit_pallas.2} parent=0 // loop_header
    %s11 = sphi 0, %s15
    %p12 = scmp.ge.s32.totalorder %s11, 4
    %s18 = sphi 0, %s37
    %s19 = sphi 0, %s33
    %s20 = sphi 0, %s29
    %s21 = sphi 0, %s18
    %s22 = sphi 0, %s19
    %s23 = sphi 0, %s20
    %s24 = sphi 0, %s21
    %s25 = sphi 0, %s22
    %s26 = sphi 0, %s23
    %s44 = sphi 0, %s46
    %s47 = sphi 0, %s44
    %s48 = sphi 0, %s47
    %s64 = sphi 0, %s48
    %s68 = sphi 0, %s68
    %s70 = sphi 0, %s68
    %s71 = sphi 0, %s70
    %s85 = sphi 0, %s71
    %s89 = sphi 0, %s89
    %s91 = sphi 0, %s89
    %s92 = sphi 0, %s91
    %s106 = sphi 0, %s92
    %s114 = sphi 0, %s116
    %s117 = sphi 0, %s114
    %s118 = sphi 0, %s117
    %s134 = sphi 0, %s118
    %s142 = sphi 0, %s144
    %s145 = sphi 0, %s142
    %s146 = sphi 0, %s145
    %s162 = sphi 0, %s146
  $region4: #{glore_unit_pallas.2} parent=0 // loop_header_branch
    %14 = sbr.rel (%p12) target = $region8
  $region5: #{glore_unit_pallas.2} parent=0 // loop_body
    %s16 = ssub.s32 %s11, 1
    %s17 = ssub.s32 %s11, 2
    %s27 = sadd.s32 1, %s20
    %p28 = scmp.ge.s32.totalorder %s27, 1
    %s29 = scalar_select %p28, 0, %s27
    %s30 = sadd.s32 1, %s19
    %s31 = scalar_select %p28, %s30, %s19
    %p32 = scmp.ge.s32.totalorder %s31, 1
    %s33 = scalar_select %p32, 0, %s31
    %s34 = sadd.s32 1, %s18
    %s35 = scalar_select %p32, %s34, %s18
    %p36 = scmp.ge.s32.totalorder %s35, 2
    %s37 = scalar_select %p36, 0, %s35
    %s38 = sadd.s32 %s19, %s20
    %s39 = sadd.s32 %s33, %s29
    %s40 = ssub.s32 %s18, %s37
    %s41 = ssub.s32 %s38, %s39
    %s42 = sor.u32 %s40, %s41
    %p43 = scmp.eq.s32.totalorder %s42, 0
    %s45 = sadd.s32 %s44, 1
    %s46 = scalar_select %p43, %s44, %s45
    %p49 = pneg %p43
    %p50 = scmp.eq.s32.totalorder %s11, 1
    %p51 = por %p49, %p50
    %p52 = scmp.ne.s32.totalorder %s44, %s47
    %p53 = scmp.eq.s32.totalorder %s11, 0
    %p54 = por %p52, %p53
    %p55 = scmp.ne.s32.totalorder %s44, %s47
    %p56 = scmp.eq.s32.totalorder %s16, 1
    %p57 = por %p55, %p56
    %p58 = scmp.ne.s32.totalorder %s47, %s48
    %p59 = scmp.eq.s32.totalorder %s16, 0
    %p60 = por %p58, %p59
    %p61 = scmp.ne.s32.totalorder %s47, %s48
    %p62 = scmp.eq.s32.totalorder %s17, 1
    %p63 = por %p61, %p62
    %p65 = scmp.ne.s32.totalorder %s48, %s64
    %p66 = scmp.eq.s32.totalorder %s17, 0
    %p67 = por %p65, %p66
    %s69 = sadd.s32 %s68, 1
    %p72 = scmp.eq.s32.totalorder %s11, 1
    %p73 = scmp.ne.s32.totalorder %s68, %s70
    %p74 = scmp.eq.s32.totalorder %s11, 0
    %p75 = por %p73, %p74
    %p76 = scmp.ne.s32.totalorder %s68, %s70
    %p77 = scmp.eq.s32.totalorder %s16, 1
    %p78 = por %p76, %p77
    %p79 = scmp.ne.s32.totalorder %s70, %s71
    %p80 = scmp.eq.s32.totalorder %s16, 0
    %p81 = por %p79, %p80
    %p82 = scmp.ne.s32.totalorder %s70, %s71
    %p83 = scmp.eq.s32.totalorder %s17, 1
    %p84 = por %p82, %p83
    %p86 = scmp.ne.s32.totalorder %s71, %s85
    %p87 = scmp.eq.s32.totalorder %s17, 0
    %p88 = por %p86, %p87
    %s90 = sadd.s32 %s89, 1
    %p93 = scmp.eq.s32.totalorder %s11, 1
    %p94 = scmp.ne.s32.totalorder %s89, %s91
    %p95 = scmp.eq.s32.totalorder %s11, 0
    %p96 = por %p94, %p95
    %p97 = scmp.ne.s32.totalorder %s89, %s91
    %p98 = scmp.eq.s32.totalorder %s16, 1
    %p99 = por %p97, %p98
    %p100 = scmp.ne.s32.totalorder %s91, %s92
    %p101 = scmp.eq.s32.totalorder %s16, 0
    %p102 = por %p100, %p101
    %p103 = scmp.ne.s32.totalorder %s91, %s92
    %p104 = scmp.eq.s32.totalorder %s17, 1
    %p105 = por %p103, %p104
    %p107 = scmp.ne.s32.totalorder %s92, %s106
    %p108 = scmp.eq.s32.totalorder %s17, 0
    %p109 = por %p107, %p108
    %s110 = ssub.s32 %s18, %s37
    %s111 = ssub.s32 %s19, %s33
    %s112 = sor.u32 %s110, %s111
    %p113 = scmp.eq.s32.totalorder %s112, 0
    %s115 = sadd.s32 %s114, 1
    %s116 = scalar_select %p113, %s114, %s115
    %p119 = pneg %p113
    %p120 = scmp.eq.s32.totalorder %s11, 1
    %p121 = por %p119, %p120
    %p122 = scmp.ne.s32.totalorder %s114, %s117
    %p123 = scmp.eq.s32.totalorder %s11, 0
    %p124 = por %p122, %p123
    %p125 = scmp.ne.s32.totalorder %s114, %s117
    %p126 = scmp.eq.s32.totalorder %s16, 1
    %p127 = por %p125, %p126
    %p128 = scmp.ne.s32.totalorder %s117, %s118
    %p129 = scmp.eq.s32.totalorder %s16, 0
    %p130 = por %p128, %p129
    %p131 = scmp.ne.s32.totalorder %s117, %s118
    %p132 = scmp.eq.s32.totalorder %s17, 1
    %p133 = por %p131, %p132
    %p135 = scmp.ne.s32.totalorder %s118, %s134
    %p136 = scmp.eq.s32.totalorder %s17, 0
    %p137 = por %p135, %p136
    %s138 = ssub.s32 %s18, %s37
    %s139 = ssub.s32 %s19, %s33
    %s140 = sor.u32 %s138, %s139
    %p141 = scmp.eq.s32.totalorder %s140, 0
    %s143 = sadd.s32 %s142, 1
    %s144 = scalar_select %p141, %s142, %s143
    %p147 = pneg %p141
    %p148 = scmp.eq.s32.totalorder %s11, 1
    %p149 = por %p147, %p148
    %p150 = scmp.ne.s32.totalorder %s142, %s145
    %p151 = scmp.eq.s32.totalorder %s11, 0
    %p152 = por %p150, %p151
    %p153 = scmp.ne.s32.totalorder %s142, %s145
    %p154 = scmp.eq.s32.totalorder %s16, 1
    %p155 = por %p153, %p154
    %p156 = scmp.ne.s32.totalorder %s145, %s146
    %p157 = scmp.eq.s32.totalorder %s16, 0
    %p158 = por %p156, %p157
    %p159 = scmp.ne.s32.totalorder %s145, %s146
    %p160 = scmp.eq.s32.totalorder %s17, 1
    %p161 = por %p159, %p160
    %p163 = scmp.ne.s32.totalorder %s146, %s162
    %p164 = scmp.eq.s32.totalorder %s17, 0
    %p165 = por %p163, %p164
    %p166 = scmp.le.s32.totalorder 1, %s11
    %p167 = scmp.lt.s32.totalorder %s11, 3
    %p168 = pnand %p166, %p167
    %p169 = pneg %p168
    // Predicated region
    $region9: #{glore_unit_pallas.2} parent=5 // pred_check
      _
    $region10: #{glore_unit_pallas.2} parent=5 // pred_check_branch
      %171 = sbr.rel (%p168) target = $region12
    $region11: #{glore_unit_pallas.2} parent=5 // pred_region
      %s172 = ssub.s32 %s11, 1
      // Predicated region
      $region13: #{glore_unit_pallas.2} parent=11 // pred_check
        %p173 = pneg %p81
      $region14: #{glore_unit_pallas.2} parent=11 // pred_check_branch
        %175 = sbr.rel (%p173) target = $region16
      $region15: #{glore_unit_pallas.2} parent=11 // pred_region
        _
      $region16: #{glore_unit_pallas.2} parent=11 // pred_fallthru
        _
      // Predicated region
      $region17: #{glore_unit_pallas.2} parent=11 // pred_check
        %p176 = pneg %p102
      $region18: #{glore_unit_pallas.2} parent=11 // pred_check_branch
        %178 = sbr.rel (%p176) target = $region20
      $region19: #{glore_unit_pallas.2} parent=11 // pred_region
        _
      $region20: #{glore_unit_pallas.2} parent=11 // pred_fallthru
        _
    $region12: #{glore_unit_pallas.2} parent=5 // pred_fallthru
      _
    %p179 = scmp.lt.s32.totalorder %s11, 2
    // Predicated region
    $region21: #{glore_unit_pallas.2} parent=5 // pred_check
      %p180 = pneg %p179
    $region22: #{glore_unit_pallas.2} parent=5 // pred_check_branch
      %182 = sbr.rel (%p180) target = $region24
    $region23: #{glore_unit_pallas.2} parent=5 // pred_region
      // Predicated region
      $region25: #{glore_unit_pallas.2} parent=23 // pred_check
        %p183 = pneg %p54
      $region26: #{glore_unit_pallas.2} parent=23 // pred_check_branch
        %185 = sbr.rel (%p183) target = $region28
      $region27: #{glore_unit_pallas.2} parent=23 // pred_region
        %s186 = sadd.s32 %s19, %s20
        %s187 = smul.u32 2, %s186
        %p188 = scmp.lt.s32.totalorder %s18, 1
        %s189 = scalar_select %p188, %s18, 1
        %p190 = scmp.lt.s32.totalorder %s187, 1
        %s191 = scalar_select %p190, %s187, 1
        %s192 = smul.addr %s189, 4
        %s193 = sadd.s32 %s191, %s192
        %s194 = smul.addr %s193, 8
        %s195 = scalar_lea.vmem %s0, %s194
        %s196 = sadd.s32 %s19, %s20
        %s197 = smul.u32 2, %s196
      $region28: #{glore_unit_pallas.2} parent=23 // pred_fallthru
        _
    $region24: #{glore_unit_pallas.2} parent=5 // pred_fallthru
      _
    %p198 = scmp.le.s32.totalorder 1, %s11
    %p199 = scmp.lt.s32.totalorder %s11, 3
    %p200 = pnand %p198, %p199
    %p201 = pneg %p200
    // Predicated region
    $region29: #{glore_unit_pallas.2} parent=5 // pred_check
      _
    $region30: #{glore_unit_pallas.2} parent=5 // pred_check_branch
      %203 = sbr.rel (%p200) target = $region32
    $region31: #{glore_unit_pallas.2} parent=5 // pred_region
      %s204 = ssub.s32 %s11, 1
      %s205 = sadd.s32 %s22, %s23
      %s206 = smul.u32 2, %s205
      %p207 = scmp.lt.s32.totalorder %s21, 1
      %s208 = scalar_select %p207, %s21, 1
      %p209 = scmp.lt.s32.totalorder %s206, 1
      %s210 = scalar_select %p209, %s206, 1
      %s211 = smul.addr %s208, 4
      %s212 = sadd.s32 %s210, %s211
      %s213 = smul.addr %s212, 8
      %s214 = scalar_lea.vmem %s0, %s213
      %p215 = pneg %p60
      %p216 = pneg %p57
      %p217 = pneg %p81
      %p218 = pneg %p78
      %p219 = pneg %p102
      %p220 = pneg %p99
      %p221 = pneg %p130
      %p222 = pneg %p127
      %p223 = scmp.lt.s32.totalorder %s21, 1
      %s224 = scalar_select %p223, %s21, 1
      %p225 = scmp.lt.s32.totalorder %s22, 0
      %s226 = scalar_select %p225, %s22, 0
      %s227 = smul.addr %s226, 3
      %s228 = smul.addr %s224, 3
      %s229 = sadd.s32 %s227, %s228
      %s230 = smul.addr %s229, 8
      %s231 = scalar_lea.vmem %s3, %s230
      %p232 = pneg %p158
      %p233 = pneg %p155
      %p234 = scmp.lt.s32.totalorder %s21, 1
      %s235 = scalar_select %p234, %s21, 1
      %p236 = scmp.lt.s32.totalorder %s22, 0
      %s237 = scalar_select %p236, %s22, 0
      %s238 = sadd.s32 %s237, %s235
      %s239 = smul.addr %s238, 8
      %s240 = scalar_lea.vmem %s4, %s239
      %s241 = sadd.s32 %s22, %s23
      %s242 = smul.u32 2, %s241
      %p243 = scmp.lt.s32.totalorder %s21, 1
      %s244 = scalar_select %p243, %s21, 1
      %p245 = scmp.lt.s32.totalorder %s242, 1
      %s246 = scalar_select %p245, %s242, 1
      %s247 = smul.addr %s244, 4
      %s248 = sadd.s32 %s246, %s247
      %s249 = smul.addr %s248, 8
      %s250 = scalar_lea.vmem %s0, %s249
      %s251 = sadd.s32 %s22, %s23
      %s252 = smul.u32 2, %s251
      %p253 = scmp.lt.s32.totalorder %s21, 1
      %s254 = scalar_select %p253, %s21, 1
      %p255 = scmp.lt.s32.totalorder %s22, 0
      %s256 = scalar_select %p255, %s22, 0
      %s257 = smul.addr %s256, 3
      %s258 = smul.addr %s254, 3
      %s259 = sadd.s32 %s257, %s258
      %s260 = smul.addr %s259, 8
      %s261 = scalar_lea.vmem %s3, %s260
      %p262 = scmp.lt.s32.totalorder %s21, 1
      %s263 = scalar_select %p262, %s21, 1
      %p264 = scmp.lt.s32.totalorder %s22, 0
      %s265 = scalar_select %p264, %s22, 0
      %s266 = sadd.s32 %s265, %s263
      %s267 = smul.addr %s266, 8
      %s268 = scalar_lea.vmem %s4, %s267
      %p269 = scmp.eq.s32.totalorder %s23, 0
      // Predicated region
      $region33: #{glore_unit_pallas.2} parent=31 // pred_check
        %p270 = pneg %p269
      $region34: #{glore_unit_pallas.2} parent=31 // pred_check_branch
        %272 = sbr.rel (%p270) target = $region36
      $region35: #{glore_unit_pallas.2} parent=31 // pred_region
        %vm273 = vcmask 64512
        %274 = vst.msk [vmem:[%s261] sm:$0xff] %vm273, 0.0
        %275 = vst.msk [vmem:[%s261 + $0x8] sm:$0xff] %vm273, 0.0
        %276 = vst.msk [vmem:[%s261 + $0x10] sm:$0xff] %vm273, 0.0
        %vm277 = vcmask 7168
        %278 = vst.msk [vmem:[%s268] sm:$0xff] %vm277, 0.0
      $region36: #{glore_unit_pallas.2} parent=31 // pred_fallthru
        _
      %v279 = vld [vmem:[%s250] sm:$0xff]
      %v280 = vld [vmem:[%s250 + $0x8] sm:$0xff]
      %v281 = vld [vmem:[%s250 + $0x10] sm:$0xff]
      %v282 = vld [vmem:[%s250 + $0x18] sm:$0xff]
      %v283 = vld [vmem:[%s1] sm:$0xff]
      %v284 = vld [vmem:[%s1 + $0x8] sm:$0xff]
      %v285 = vld [vmem:[%s1 + $0x10] sm:$0xff]
      %v286 = vld [vmem:[%s2] sm:$0xff]
      %v287 = vld [vmem:[%s2 + $0x8] sm:$0xff]
      %v288 = vld [vmem:[%s2 + $0x10] sm:$0xff]
      %290 = vset.pattern.permute.xlu0 0
      %291 = vperm.xlu0 %290, %v286
      %v292 = vpop.permute.xlu0 %291
      %295 = vset.pattern.permute.xlu0 0
      %296 = vperm.xlu0 %295, %v287
      %v297 = vpop.permute.xlu0 %296
      %300 = vset.pattern.permute.xlu0 0
      %301 = vperm.xlu0 %300, %v288
      %v302 = vpop.permute.xlu0 %301
      %vm304 = vcmask 130048
      %v306 = vsel %vm304, %v283, 0
      %v309 = vsel %vm304, %v284, 0
      %v312 = vsel %vm304, %v285, 0
      %314 = vmatprep.subr.mxu0 %v280
      %315 = vmatpush1.msra.mxu0 %v279
      %316 = vmatprep.subr.mxu0 %v282
      %317 = vmatpush1.msra.mxu0 %v281
      %318 = vmatprep.subr.mxu0 0.0
      %319 = vmatpush1.msra.mxu0 0.0
      %320 = vmatprep.subr.mxu0 0.0
      %321 = vmatpush1.msra.mxu0 0.0
      %322 = vmatprep.subr.mxu0 0.0
      %323 = vmatpush1.msra.mxu0 0.0
      %324 = vmatprep.subr.mxu0 0.0
      %325 = vmatpush1.msra.mxu0 0.0
      %326 = vmatprep.subr.mxu0 0.0
      %327 = vmatpush1.msra.mxu0 0.0
      %328 = vmatprep.subr.mxu0 0.0
      %329 = vmatpush1.msra.mxu0 0.0
      %330 = vmatprep.subr.mxu0 0.0
      %331 = vmatpush1.msra.mxu0 0.0
      %332 = vmatprep.subr.mxu0 0.0
      %333 = vmatpush1.msra.mxu0 0.0
      %334 = vmatprep.subr.mxu0 0.0
      %335 = vmatpush1.msra.mxu0 0.0
      %336 = vmatprep.subr.mxu0 0.0
      %337 = vmatpush1.msra.mxu0 0.0
      %338 = vmatprep.subr.mxu0 0.0
      %339 = vmatpush1.msra.mxu0 0.0
      %340 = vmatprep.subr.mxu0 0.0
      %341 = vmatpush1.msra.mxu0 0.0
      %342 = vmatprep.subr.mxu0 0.0
      %343 = vmatpush1.msra.mxu0 0.0
      %344 = vmatprep.subr.mxu0 0.0
      %345 = vmatpush1.msra.mxu0 0.0
      %346 = vmatprep.subr.mxu0 0.0
      %347 = vmatpush1.msra.mxu0 0.0
      %348 = vmatprep.subr.mxu0 0.0
      %349 = vmatpush1.msra.mxu0 0.0
      %350 = vmatprep.subr.mxu0 0.0
      %351 = vmatpush1.msra.mxu0 0.0
      %352 = vmatprep.subr.mxu0 0.0
      %353 = vmatpush1.msra.mxu0 0.0
      %354 = vmatprep.subr.mxu0 0.0
      %355 = vmatpush1.msra.mxu0 0.0
      %356 = vmatprep.subr.mxu0 0.0
      %357 = vmatpush1.msra.mxu0 0.0
      %358 = vmatprep.subr.mxu0 0.0
      %359 = vmatpush1.msra.mxu0 0.0
      %360 = vmatprep.subr.mxu0 0.0
      %361 = vmatpush1.msra.mxu0 0.0
      %362 = vmatprep.subr.mxu0 0.0
      %363 = vmatpush1.msra.mxu0 0.0
      %364 = vmatprep.subr.mxu0 0.0
      %365 = vmatpush1.msra.mxu0 0.0
      %366 = vmatprep.subr.mxu0 0.0
      %367 = vmatpush1.msra.mxu0 0.0
      %368 = vmatprep.subr.mxu0 0.0
      %369 = vmatpush1.msra.mxu0 0.0
      %370 = vmatprep.subr.mxu0 0.0
      %371 = vmatpush1.msra.mxu0 0.0
      %372 = vmatprep.subr.mxu0 0.0
      %373 = vmatpush1.msra.mxu0 0.0
      %374 = vmatprep.subr.mxu0 0.0
      %375 = vmatpush1.msra.mxu0 0.0
      %376 = vmatprep.subr.mxu0 0.0
      %377 = vmatpush1.msra.mxu0 0.0
      %378 = vmatprep.mubr.f32.mxu0 0.0
      %379 = vmatmul.mubr.f32.gmra.mrb[0].mxu0 %v306
      %v380 = vpop.f32.mrb[0].mxu0
      %v381 = vadd.f32 %v292, %v380
      %v382 = vpop.f32.mrb[0].mxu0
      %v383 = vadd.f32 %v292, %v382
      %384 = vmatprep.mubr.f32.mxu0 0.0
      %385 = vmatmul.mubr.f32.gmra.mrb[0].mxu0 %v309
      %v386 = vpop.f32.mrb[0].mxu0
      %v387 = vadd.f32 %v297, %v386
      %v388 = vpop.f32.mrb[0].mxu0
      %v389 = vadd.f32 %v297, %v388
      %390 = vmatprep.mubr.f32.mxu0 0.0
      %391 = vmatmul.mubr.f32.gmra.mrb[0].mxu0 %v312
      %v392 = vpop.f32.mrb[0].mxu0
      %v393 = vadd.f32 %v302, %v392
      %v394 = vpop.f32.mrb[0].mxu0
      %v395 = vadd.f32 %v302, %v394
      %396 = vdwg.mxu0
      %v397 = vld [vmem:[%s268] sm:$0xff]
      %v398 = vadd.f32 %v393, %v395
      %399 = vadd.xlane.f32.xlu0 %v398
      %v400 = vpop.xlane.xlu0 %399
      %v401 = vadd.f32 %v397, %v400
      %vm402 = vcmask 7168
      %403 = vst.msk [vmem:[%s268] sm:$0xff] %vm402, %v401
      %v404 = vld [vmem:[%s261] sm:$0xff]
      %v405 = vld [vmem:[%s261 + $0x8] sm:$0xff]
      %v406 = vld [vmem:[%s261 + $0x10] sm:$0xff]
      %407 = vmatprep.subr.mxu0 %v395
      %408 = vmatpush1.xpose.msra.mxu0 %v393
      %409 = vmatprep.subr.mxu0 0.0
      %410 = vmatpush1.xpose.msra.mxu0 0.0
      %411 = vmatprep.subr.mxu0 0.0
      %412 = vmatpush1.xpose.msra.mxu0 0.0
      %413 = vmatprep.subr.mxu0 0.0
      %414 = vmatpush1.xpose.msra.mxu0 0.0
      %415 = vmatprep.subr.mxu0 0.0
      %416 = vmatpush1.xpose.msra.mxu0 0.0
      %417 = vmatprep.subr.mxu0 0.0
      %418 = vmatpush1.xpose.msra.mxu0 0.0
      %419 = vmatprep.subr.mxu0 0.0
      %420 = vmatpush1.xpose.msra.mxu0 0.0
      %421 = vmatprep.subr.mxu0 0.0
      %422 = vmatpush1.xpose.msra.mxu0 0.0
      %423 = vmatprep.subr.mxu0 0.0
      %424 = vmatpush1.xpose.msra.mxu0 0.0
      %425 = vmatprep.subr.mxu0 0.0
      %426 = vmatpush1.xpose.msra.mxu0 0.0
      %427 = vmatprep.subr.mxu0 0.0
      %428 = vmatpush1.xpose.msra.mxu0 0.0
      %429 = vmatprep.subr.mxu0 0.0
      %430 = vmatpush1.xpose.msra.mxu0 0.0
      %431 = vmatprep.subr.mxu0 0.0
      %432 = vmatpush1.xpose.msra.mxu0 0.0
      %433 = vmatprep.subr.mxu0 0.0
      %434 = vmatpush1.xpose.msra.mxu0 0.0
      %435 = vmatprep.subr.mxu0 0.0
      %436 = vmatpush1.xpose.msra.mxu0 0.0
      %437 = vmatprep.subr.mxu0 0.0
      %438 = vmatpush1.xpose.msra.mxu0 0.0
      %439 = vmatprep.subr.mxu0 0.0
      %440 = vmatpush1.xpose.msra.mxu0 0.0
      %441 = vmatprep.subr.mxu0 0.0
      %442 = vmatpush1.xpose.msra.mxu0 0.0
      %443 = vmatprep.subr.mxu0 0.0
      %444 = vmatpush1.xpose.msra.mxu0 0.0
      %445 = vmatprep.subr.mxu0 0.0
      %446 = vmatpush1.xpose.msra.mxu0 0.0
      %447 = vmatprep.subr.mxu0 0.0
      %448 = vmatpush1.xpose.msra.mxu0 0.0
      %449 = vmatprep.subr.mxu0 0.0
      %450 = vmatpush1.xpose.msra.mxu0 0.0
      %451 = vmatprep.subr.mxu0 0.0
      %452 = vmatpush1.xpose.msra.mxu0 0.0
      %453 = vmatprep.subr.mxu0 0.0
      %454 = vmatpush1.xpose.msra.mxu0 0.0
      %455 = vmatprep.subr.mxu0 0.0
      %456 = vmatpush1.xpose.msra.mxu0 0.0
      %457 = vmatprep.subr.mxu0 0.0
      %458 = vmatpush1.xpose.msra.mxu0 0.0
      %459 = vmatprep.subr.mxu0 0.0
      %460 = vmatpush1.xpose.msra.mxu0 0.0
      %461 = vmatprep.subr.mxu0 0.0
      %462 = vmatpush1.xpose.msra.mxu0 0.0
      %463 = vmatprep.subr.mxu0 0.0
      %464 = vmatpush1.xpose.msra.mxu0 0.0
      %465 = vmatprep.subr.mxu0 0.0
      %466 = vmatpush1.xpose.msra.mxu0 0.0
      %467 = vmatprep.subr.mxu0 0.0
      %468 = vmatpush1.xpose.msra.mxu0 0.0
      %469 = vmatprep.subr.mxu0 0.0
      %470 = vmatpush1.xpose.msra.mxu0 0.0
      %471 = vmatprep.mubr.f32.mxu0 %v383
      %472 = vmatmul.mubr.f32.gmra.mrb[0].mxu0 %v381
      %v473 = vpop.f32.mrb[0].mxu0
      %v474 = vadd.f32 0.0, %v473
      %v475 = vpop.f32.mrb[0].mxu0
      %476 = vmatprep.mubr.f32.mxu0 %v389
      %477 = vmatmul.mubr.f32.gmra.mrb[0].mxu0 %v387
      %v478 = vpop.f32.mrb[0].mxu0
      %v479 = vadd.f32 0.0, %v478
      %v480 = vpop.f32.mrb[0].mxu0
      %481 = vmatprep.mubr.f32.mxu0 %v395
      %482 = vmatmul.mubr.f32.gmra.mrb[0].mxu0 %v393
      %v483 = vpop.f32.mrb[0].mxu0
      %v484 = vadd.f32 0.0, %v483
      %v485 = vpop.f32.mrb[0].mxu0
      %486 = vdwg.mxu0
      %v487 = vadd.f32 %v404, %v474
      %v488 = vadd.f32 %v405, %v479
      %v489 = vadd.f32 %v406, %v484
      %vm490 = vcmask 64512
      %491 = vst.msk [vmem:[%s261] sm:$0xff] %vm490, %v487
      %492 = vst.msk [vmem:[%s261 + $0x8] sm:$0xff] %vm490, %v488
      %493 = vst.msk [vmem:[%s261 + $0x10] sm:$0xff] %vm490, %v489
      %p494 = scmp.lt.s32.totalorder %s21, 1
      %s495 = scalar_select %p494, %s21, 1
      %p496 = scmp.lt.s32.totalorder %s22, 0
      %s497 = scalar_select %p496, %s22, 0
      %s498 = smul.addr %s497, 3
      %s499 = smul.addr %s495, 3
      %s500 = sadd.s32 %s498, %s499
      %s501 = smul.addr %s500, 8
      %s502 = scalar_lea.vmem %s3, %s501
      %p503 = scmp.lt.s32.totalorder %s21, 1
      %s504 = scalar_select %p503, %s21, 1
      %p505 = scmp.lt.s32.totalorder %s22, 0
      %s506 = scalar_select %p505, %s22, 0
      %s507 = sadd.s32 %s506, %s504
      %s508 = smul.addr %s507, 8
      %s509 = scalar_lea.vmem %s4, %s508
      // Predicated region
      $region37: #{glore_unit_pallas.2} parent=31 // pred_check
        %p510 = pneg %p127
      $region38: #{glore_unit_pallas.2} parent=31 // pred_check_branch
        %512 = sbr.rel (%p510) target = $region40
      $region39: #{glore_unit_pallas.2} parent=31 // pred_region
        _
      $region40: #{glore_unit_pallas.2} parent=31 // pred_fallthru
        _
      // Predicated region
      $region41: #{glore_unit_pallas.2} parent=31 // pred_check
        %p513 = pneg %p155
      $region42: #{glore_unit_pallas.2} parent=31 // pred_check_branch
        %515 = sbr.rel (%p513) target = $region44
      $region43: #{glore_unit_pallas.2} parent=31 // pred_region
        _
      $region44: #{glore_unit_pallas.2} parent=31 // pred_fallthru
        _
    $region32: #{glore_unit_pallas.2} parent=5 // pred_fallthru
      _
    %p516 = scmp.le.s32.totalorder 2, %s11
    // Predicated region
    $region45: #{glore_unit_pallas.2} parent=5 // pred_check
      %p517 = pneg %p516
    $region46: #{glore_unit_pallas.2} parent=5 // pred_check_branch
      %519 = sbr.rel (%p517) target = $region48
    $region47: #{glore_unit_pallas.2} parent=5 // pred_region
      %s520 = ssub.s32 %s11, 2
      // Predicated region
      $region49: #{glore_unit_pallas.2} parent=47 // pred_check
        %p521 = pneg %p133
      $region50: #{glore_unit_pallas.2} parent=47 // pred_check_branch
        %523 = sbr.rel (%p521) target = $region52
      $region51: #{glore_unit_pallas.2} parent=47 // pred_region
        %p524 = scmp.lt.s32.totalorder %s24, 1
        %s525 = scalar_select %p524, %s24, 1
        %p526 = scmp.lt.s32.totalorder %s25, 0
        %s527 = scalar_select %p526, %s25, 0
        %s528 = smul.addr %s527, 3
        %s529 = smul.addr %s525, 3
        %s530 = sadd.s32 %s528, %s529
        %s531 = smul.addr %s530, 8
        %s532 = scalar_lea.vmem %s3, %s531
      $region52: #{glore_unit_pallas.2} parent=47 // pred_fallthru
        _
      // Predicated region
      $region53: #{glore_unit_pallas.2} parent=47 // pred_check
        %p533 = pneg %p161
      $region54: #{glore_unit_pallas.2} parent=47 // pred_check_branch
        %535 = sbr.rel (%p533) target = $region56
      $region55: #{glore_unit_pallas.2} parent=47 // pred_region
        %p536 = scmp.lt.s32.totalorder %s24, 1
        %s537 = scalar_select %p536, %s24, 1
        %p538 = scmp.lt.s32.totalorder %s25, 0
        %s539 = scalar_select %p538, %s25, 0
        %s540 = sadd.s32 %s539, %s537
        %s541 = smul.addr %s540, 8
        %s542 = scalar_lea.vmem %s4, %s541
      $region56: #{glore_unit_pallas.2} parent=47 // pred_fallthru
        _
    $region48: #{glore_unit_pallas.2} parent=5 // pred_fallthru
      _
  $region6: #{glore_unit_pallas.2} parent=0 // loop_footer
    %s15 = sadd.s32 1, %s11
  $region7: #{glore_unit_pallas.2} parent=0 // loop_footer_branch
    %10 = sbr.rel target = $region3
  $region8: #{glore_unit_pallas.2} parent=0 // loop_exit
    _

// kernel: glore_unit_pallas.3
$region0: #{glore_unit_pallas.3}
  #allocation0 [shape = 'u32[]', space=smem, size = 0x4, offset = 0x4, fixed_abs, tag = 'smem constant byte address 0x4 - core index']
  #allocation1 [shape = 'u32[144,128]{1,0:T(1,128)}', space=vmem, size = 0x12000, scoped, tag = 'internal scratch']
  %s0 = inlined_call_operand.vmem [shape: f32[2,16,256], index: 0, kind: input, shape index: {}]
  %s1 = inlined_call_operand.vmem [shape: f32[2,16,8], index: 1, kind: input, shape index: {}]
  %s2 = inlined_call_operand.vmem [shape: f32[8,16], index: 2, kind: input, shape index: {}]
  %s3 = inlined_call_operand.vmem [shape: f32[8,1], index: 3, kind: input, shape index: {}]
  %s4 = inlined_call_operand.vmem [shape: f32[16,1], index: 4, kind: input, shape index: {}]
  %s5 = inlined_call_operand.vmem [shape: f32[16,1], index: 5, kind: input, shape index: {}]
  %s6 = inlined_call_operand.vmem [shape: f32[2,16,256], index: 6, kind: output, shape index: {}]
  %s7 = sld [smem:[#allocation0]]
  $region57: #{glore_unit_pallas.3} parent=0
    _
  %s9 = ssub.s32 1, %s7
  %s10 = scalar_select 0, %s9, %s7
  loop: start=0, step=1, limit=4
  $region2: #{glore_unit_pallas.3} parent=0 // loop_pre_header
    _
  $region3: #{glore_unit_pallas.3} parent=0 // loop_header
    %s12 = sphi 0, %s16
    %p13 = scmp.ge.s32.totalorder %s12, 4
    %s19 = sphi 0, %s31
    %s20 = sphi 0, %s27
    %s21 = sphi 0, %s19
    %s22 = sphi 0, %s20
    %s23 = sphi 0, %s21
    %s24 = sphi 0, %s22
    %s36 = sphi 0, %s38
    %s39 = sphi 0, %s36
    %s40 = sphi 0, %s39
    %s56 = sphi 0, %s40
    %s62 = sphi 0, %s64
    %s65 = sphi 0, %s62
    %s66 = sphi 0, %s65
    %s82 = sphi 0, %s66
    %s86 = sphi 0, %s86
    %s88 = sphi 0, %s86
    %s89 = sphi 0, %s88
    %s103 = sphi 0, %s89
    %s107 = sphi 0, %s107
    %s109 = sphi 0, %s107
    %s110 = sphi 0, %s109
    %s124 = sphi 0, %s110
    %s128 = sphi 0, %s128
    %s130 = sphi 0, %s128
    %s131 = sphi 0, %s130
    %s145 = sphi 0, %s131
    %s149 = sphi 0, %s149
    %s151 = sphi 0, %s149
    %s152 = sphi 0, %s151
    %s166 = sphi 0, %s152
    %s174 = sphi 0, %s176
    %s177 = sphi 0, %s174
    %s178 = sphi 0, %s177
    %s194 = sphi 0, %s178
  $region4: #{glore_unit_pallas.3} parent=0 // loop_header_branch
    %15 = sbr.rel (%p13) target = $region8
  $region5: #{glore_unit_pallas.3} parent=0 // loop_body
    %s17 = ssub.s32 %s12, 1
    %s18 = ssub.s32 %s12, 2
    %s25 = sadd.s32 1, %s20
    %p26 = scmp.ge.s32.totalorder %s25, 1
    %s27 = scalar_select %p26, 0, %s25
    %s28 = sadd.s32 1, %s19
    %s29 = scalar_select %p26, %s28, %s19
    %p30 = scmp.ge.s32.totalorder %s29, 2
    %s31 = scalar_select %p30, 0, %s29
    %s32 = ssub.s32 %s19, %s31
    %s33 = ssub.s32 %s20, %s27
    %s34 = sor.u32 %s32, %s33
    %p35 = scmp.eq.s32.totalorder %s34, 0
    %s37 = sadd.s32 %s36, 1
    %s38 = scalar_select %p35, %s36, %s37
    %p41 = pneg %p35
    %p42 = scmp.eq.s32.totalorder %s12, 1
    %p43 = por %p41, %p42
    %p44 = scmp.ne.s32.totalorder %s36, %s39
    %p45 = scmp.eq.s32.totalorder %s12, 0
    %p46 = por %p44, %p45
    %p47 = scmp.ne.s32.totalorder %s36, %s39
    %p48 = scmp.eq.s32.totalorder %s17, 1
    %p49 = por %p47, %p48
    %p50 = scmp.ne.s32.totalorder %s39, %s40
    %p51 = scmp.eq.s32.totalorder %s17, 0
    %p52 = por %p50, %p51
    %p53 = scmp.ne.s32.totalorder %s39, %s40
    %p54 = scmp.eq.s32.totalorder %s18, 1
    %p55 = por %p53, %p54
    %p57 = scmp.ne.s32.totalorder %s40, %s56
    %p58 = scmp.eq.s32.totalorder %s18, 0
    %p59 = por %p57, %p58
    %s60 = ssub.s32 %s19, %s31
    %p61 = scmp.eq.s32.totalorder %s60, 0
    %s63 = sadd.s32 %s62, 1
    %s64 = scalar_select %p61, %s62, %s63
    %p67 = pneg %p61
    %p68 = scmp.eq.s32.totalorder %s12, 1
    %p69 = por %p67, %p68
    %p70 = scmp.ne.s32.totalorder %s62, %s65
    %p71 = scmp.eq.s32.totalorder %s12, 0
    %p72 = por %p70, %p71
    %p73 = scmp.ne.s32.totalorder %s62, %s65
    %p74 = scmp.eq.s32.totalorder %s17, 1
    %p75 = por %p73, %p74
    %p76 = scmp.ne.s32.totalorder %s65, %s66
    %p77 = scmp.eq.s32.totalorder %s17, 0
    %p78 = por %p76, %p77
    %p79 = scmp.ne.s32.totalorder %s65, %s66
    %p80 = scmp.eq.s32.totalorder %s18, 1
    %p81 = por %p79, %p80
    %p83 = scmp.ne.s32.totalorder %s66, %s82
    %p84 = scmp.eq.s32.totalorder %s18, 0
    %p85 = por %p83, %p84
    %s87 = sadd.s32 %s86, 1
    %p90 = scmp.eq.s32.totalorder %s12, 1
    %p91 = scmp.ne.s32.totalorder %s86, %s88
    %p92 = scmp.eq.s32.totalorder %s12, 0
    %p93 = por %p91, %p92
    %p94 = scmp.ne.s32.totalorder %s86, %s88
    %p95 = scmp.eq.s32.totalorder %s17, 1
    %p96 = por %p94, %p95
    %p97 = scmp.ne.s32.totalorder %s88, %s89
    %p98 = scmp.eq.s32.totalorder %s17, 0
    %p99 = por %p97, %p98
    %p100 = scmp.ne.s32.totalorder %s88, %s89
    %p101 = scmp.eq.s32.totalorder %s18, 1
    %p102 = por %p100, %p101
    %p104 = scmp.ne.s32.totalorder %s89, %s103
    %p105 = scmp.eq.s32.totalorder %s18, 0
    %p106 = por %p104, %p105
    %s108 = sadd.s32 %s107, 1
    %p111 = scmp.eq.s32.totalorder %s12, 1
    %p112 = scmp.ne.s32.totalorder %s107, %s109
    %p113 = scmp.eq.s32.totalorder %s12, 0
    %p114 = por %p112, %p113
    %p115 = scmp.ne.s32.totalorder %s107, %s109
    %p116 = scmp.eq.s32.totalorder %s17, 1
    %p117 = por %p115, %p116
    %p118 = scmp.ne.s32.totalorder %s109, %s110
    %p119 = scmp.eq.s32.totalorder %s17, 0
    %p120 = por %p118, %p119
    %p121 = scmp.ne.s32.totalorder %s109, %s110
    %p122 = scmp.eq.s32.totalorder %s18, 1
    %p123 = por %p121, %p122
    %p125 = scmp.ne.s32.totalorder %s110, %s124
    %p126 = scmp.eq.s32.totalorder %s18, 0
    %p127 = por %p125, %p126
    %s129 = sadd.s32 %s128, 1
    %p132 = scmp.eq.s32.totalorder %s12, 1
    %p133 = scmp.ne.s32.totalorder %s128, %s130
    %p134 = scmp.eq.s32.totalorder %s12, 0
    %p135 = por %p133, %p134
    %p136 = scmp.ne.s32.totalorder %s128, %s130
    %p137 = scmp.eq.s32.totalorder %s17, 1
    %p138 = por %p136, %p137
    %p139 = scmp.ne.s32.totalorder %s130, %s131
    %p140 = scmp.eq.s32.totalorder %s17, 0
    %p141 = por %p139, %p140
    %p142 = scmp.ne.s32.totalorder %s130, %s131
    %p143 = scmp.eq.s32.totalorder %s18, 1
    %p144 = por %p142, %p143
    %p146 = scmp.ne.s32.totalorder %s131, %s145
    %p147 = scmp.eq.s32.totalorder %s18, 0
    %p148 = por %p146, %p147
    %s150 = sadd.s32 %s149, 1
    %p153 = scmp.eq.s32.totalorder %s12, 1
    %p154 = scmp.ne.s32.totalorder %s149, %s151
    %p155 = scmp.eq.s32.totalorder %s12, 0
    %p156 = por %p154, %p155
    %p157 = scmp.ne.s32.totalorder %s149, %s151
    %p158 = scmp.eq.s32.totalorder %s17, 1
    %p159 = por %p157, %p158
    %p160 = scmp.ne.s32.totalorder %s151, %s152
    %p161 = scmp.eq.s32.totalorder %s17, 0
    %p162 = por %p160, %p161
    %p163 = scmp.ne.s32.totalorder %s151, %s152
    %p164 = scmp.eq.s32.totalorder %s18, 1
    %p165 = por %p163, %p164
    %p167 = scmp.ne.s32.totalorder %s152, %s166
    %p168 = scmp.eq.s32.totalorder %s18, 0
    %p169 = por %p167, %p168
    %s170 = ssub.s32 %s19, %s31
    %s171 = ssub.s32 %s20, %s27
    %s172 = sor.u32 %s170, %s171
    %p173 = scmp.eq.s32.totalorder %s172, 0
    %s175 = sadd.s32 %s174, 1
    %s176 = scalar_select %p173, %s174, %s175
    %p179 = pneg %p173
    %p180 = scmp.eq.s32.totalorder %s12, 1
    %p181 = por %p179, %p180
    %p182 = scmp.ne.s32.totalorder %s174, %s177
    %p183 = scmp.eq.s32.totalorder %s12, 0
    %p184 = por %p182, %p183
    %p185 = scmp.ne.s32.totalorder %s174, %s177
    %p186 = scmp.eq.s32.totalorder %s17, 1
    %p187 = por %p185, %p186
    %p188 = scmp.ne.s32.totalorder %s177, %s178
    %p189 = scmp.eq.s32.totalorder %s17, 0
    %p190 = por %p188, %p189
    %p191 = scmp.ne.s32.totalorder %s177, %s178
    %p192 = scmp.eq.s32.totalorder %s18, 1
    %p193 = por %p191, %p192
    %p195 = scmp.ne.s32.totalorder %s178, %s194
    %p196 = scmp.eq.s32.totalorder %s18, 0
    %p197 = por %p195, %p196
    %p198 = scmp.le.s32.totalorder 1, %s12
    %p199 = scmp.lt.s32.totalorder %s12, 3
    %p200 = pnand %p198, %p199
    %p201 = pneg %p200
    // Predicated region
    $region9: #{glore_unit_pallas.3} parent=5 // pred_check
      _
    $region10: #{glore_unit_pallas.3} parent=5 // pred_check_branch
      %203 = sbr.rel (%p200) target = $region12
    $region11: #{glore_unit_pallas.3} parent=5 // pred_region
      %s204 = ssub.s32 %s12, 1
      // Predicated region
      $region13: #{glore_unit_pallas.3} parent=11 // pred_check
        %p205 = pneg %p99
      $region14: #{glore_unit_pallas.3} parent=11 // pred_check_branch
        %207 = sbr.rel (%p205) target = $region16
      $region15: #{glore_unit_pallas.3} parent=11 // pred_region
        _
      $region16: #{glore_unit_pallas.3} parent=11 // pred_fallthru
        _
      // Predicated region
      $region17: #{glore_unit_pallas.3} parent=11 // pred_check
        %p208 = pneg %p120
      $region18: #{glore_unit_pallas.3} parent=11 // pred_check_branch
        %210 = sbr.rel (%p208) target = $region20
      $region19: #{glore_unit_pallas.3} parent=11 // pred_region
        _
      $region20: #{glore_unit_pallas.3} parent=11 // pred_fallthru
        _
      // Predicated region
      $region21: #{glore_unit_pallas.3} parent=11 // pred_check
        %p211 = pneg %p141
      $region22: #{glore_unit_pallas.3} parent=11 // pred_check_branch
        %213 = sbr.rel (%p211) target = $region24
      $region23: #{glore_unit_pallas.3} parent=11 // pred_region
        _
      $region24: #{glore_unit_pallas.3} parent=11 // pred_fallthru
        _
      // Predicated region
      $region25: #{glore_unit_pallas.3} parent=11 // pred_check
        %p214 = pneg %p162
      $region26: #{glore_unit_pallas.3} parent=11 // pred_check_branch
        %216 = sbr.rel (%p214) target = $region28
      $region27: #{glore_unit_pallas.3} parent=11 // pred_region
        _
      $region28: #{glore_unit_pallas.3} parent=11 // pred_fallthru
        _
    $region12: #{glore_unit_pallas.3} parent=5 // pred_fallthru
      _
    %p217 = scmp.lt.s32.totalorder %s12, 2
    // Predicated region
    $region29: #{glore_unit_pallas.3} parent=5 // pred_check
      %p218 = pneg %p217
    $region30: #{glore_unit_pallas.3} parent=5 // pred_check_branch
      %220 = sbr.rel (%p218) target = $region32
    $region31: #{glore_unit_pallas.3} parent=5 // pred_region
      // Predicated region
      $region33: #{glore_unit_pallas.3} parent=31 // pred_check
        %p221 = pneg %p46
      $region34: #{glore_unit_pallas.3} parent=31 // pred_check_branch
        %223 = sbr.rel (%p221) target = $region36
      $region35: #{glore_unit_pallas.3} parent=31 // pred_region
        %s224 = smul.u32 2, %s20
        %p225 = scmp.lt.s32.totalorder %s19, 1
        %s226 = scalar_select %p225, %s19, 1
        %p227 = scmp.lt.s32.totalorder %s224, 1
        %s228 = scalar_select %p227, %s224, 1
        %s229 = smul.addr %s226, 4
        %s230 = sadd.s32 %s228, %s229
        %s231 = smul.addr %s230, 8
        %s232 = scalar_lea.vmem %s0, %s231
        %s233 = smul.u32 2, %s20
      $region36: #{glore_unit_pallas.3} parent=31 // pred_fallthru
        _
      // Predicated region
      $region37: #{glore_unit_pallas.3} parent=31 // pred_check
        %p234 = pneg %p72
      $region38: #{glore_unit_pallas.3} parent=31 // pred_check_branch
        %236 = sbr.rel (%p234) target = $region40
      $region39: #{glore_unit_pallas.3} parent=31 // pred_region
        %p237 = scmp.lt.s32.totalorder %s19, 1
        %s238 = scalar_select %p237, %s19, 1
        %s239 = smul.addr %s238, 2
        %s240 = smul.addr %s239, 8
        %s241 = scalar_lea.vmem %s1, %s240
      $region40: #{glore_unit_pallas.3} parent=31 // pred_fallthru
        _
    $region32: #{glore_unit_pallas.3} parent=5 // pred_fallthru
      _
    %p242 = scmp.le.s32.totalorder 1, %s12
    %p243 = scmp.lt.s32.totalorder %s12, 3
    %p244 = pnand %p242, %p243
    %p245 = pneg %p244
    // Predicated region
    $region41: #{glore_unit_pallas.3} parent=5 // pred_check
      _
    $region42: #{glore_unit_pallas.3} parent=5 // pred_check_branch
      %247 = sbr.rel (%p244) target = $region44
    $region43: #{glore_unit_pallas.3} parent=5 // pred_region
      %s248 = ssub.s32 %s12, 1
      %s249 = smul.u32 2, %s22
      %p250 = scmp.lt.s32.totalorder %s21, 1
      %s251 = scalar_select %p250, %s21, 1
      %p252 = scmp.lt.s32.totalorder %s249, 1
      %s253 = scalar_select %p252, %s249, 1
      %s254 = smul.addr %s251, 4
      %s255 = sadd.s32 %s253, %s254
      %s256 = smul.addr %s255, 8
      %s257 = scalar_lea.vmem %s0, %s256
      %p258 = pneg %p52
      %p259 = pneg %p49
      %p260 = scmp.lt.s32.totalorder %s21, 1
      %s261 = scalar_select %p260, %s21, 1
      %s262 = smul.addr %s261, 2
      %s263 = smul.addr %s262, 8
      %s264 = scalar_lea.vmem %s1, %s263
      %p265 = pneg %p78
      %p266 = pneg %p75
      %p267 = pneg %p99
      %p268 = pneg %p96
      %p269 = pneg %p120
      %p270 = pneg %p117
      %p271 = pneg %p141
      %p272 = pneg %p138
      %p273 = pneg %p162
      %p274 = pneg %p159
      %p275 = pneg %p190
      %p276 = pneg %p187
      %s277 = smul.u32 2, %s22
      %p278 = scmp.lt.s32.totalorder %s21, 1
      %s279 = scalar_select %p278, %s21, 1
      %p280 = scmp.lt.s32.totalorder %s277, 1
      %s281 = scalar_select %p280, %s277, 1
      %s282 = smul.addr %s279, 4
      %s283 = sadd.s32 %s281, %s282
      %s284 = smul.addr %s283, 8
      %s285 = scalar_lea.vmem %s6, %s284
      %s286 = smul.u32 2, %s22
      %p287 = scmp.lt.s32.totalorder %s21, 1
      %s288 = scalar_select %p287, %s21, 1
      %p289 = scmp.lt.s32.totalorder %s286, 1
      %s290 = scalar_select %p289, %s286, 1
      %s291 = smul.addr %s288, 4
      %s292 = sadd.s32 %s290, %s291
      %s293 = smul.addr %s292, 8
      %s294 = scalar_lea.vmem %s0, %s293
      %s295 = smul.u32 2, %s22
      %p296 = scmp.lt.s32.totalorder %s21, 1
      %s297 = scalar_select %p296, %s21, 1
      %s298 = smul.addr %s297, 2
      %s299 = smul.addr %s298, 8
      %s300 = scalar_lea.vmem %s1, %s299
      %s301 = smul.u32 2, %s22
      %p302 = scmp.lt.s32.totalorder %s21, 1
      %s303 = scalar_select %p302, %s21, 1
      %p304 = scmp.lt.s32.totalorder %s301, 1
      %s305 = scalar_select %p304, %s301, 1
      %s306 = smul.addr %s303, 4
      %s307 = sadd.s32 %s305, %s306
      %s308 = smul.addr %s307, 8
      %s309 = scalar_lea.vmem %s6, %s308
      %s310 = smul.u32 2, %s22
      %v311 = vld [vmem:[%s294] sm:$0xff]
      %v312 = vld [vmem:[%s294 + $0x8] sm:$0xff]
      %v313 = vld [vmem:[%s294 + $0x10] sm:$0xff]
      %v314 = vld [vmem:[%s294 + $0x18] sm:$0xff]
      %v315 = vld [vmem:[%s2] sm:$0xff]
      %v316 = vld [vmem:[%s3] sm:$0xff]
      %318 = vset.pattern.permute.xlu0 0
      %319 = vperm.xlu0 %318, %v316
      %v320 = vpop.permute.xlu0 %319
      %vm322 = vcmask 130048
      %v324 = vsel %vm322, %v315, 0
      %326 = vmatprep.subr.mxu0 %v312
      %327 = vmatpush1.msra.mxu0 %v311
      %328 = vmatprep.subr.mxu0 %v314
      %329 = vmatpush1.msra.mxu0 %v313
      %330 = vmatprep.subr.mxu0 0.0
      %331 = vmatpush1.msra.mxu0 0.0
      %332 = vmatprep.subr.mxu0 0.0
      %333 = vmatpush1.msra.mxu0 0.0
      %334 = vmatprep.subr.mxu0 0.0
      %335 = vmatpush1.msra.mxu0 0.0
      %336 = vmatprep.subr.mxu0 0.0
      %337 = vmatpush1.msra.mxu0 0.0
      %338 = vmatprep.subr.mxu0 0.0
      %339 = vmatpush1.msra.mxu0 0.0
      %340 = vmatprep.subr.mxu0 0.0
      %341 = vmatpush1.msra.mxu0 0.0
      %342 = vmatprep.subr.mxu0 0.0
      %343 = vmatpush1.msra.mxu0 0.0
      %344 = vmatprep.subr.mxu0 0.0
      %345 = vmatpush1.msra.mxu0 0.0
      %346 = vmatprep.subr.mxu0 0.0
      %347 = vmatpush1.msra.mxu0 0.0
      %348 = vmatprep.subr.mxu0 0.0
      %349 = vmatpush1.msra.mxu0 0.0
      %350 = vmatprep.subr.mxu0 0.0
      %351 = vmatpush1.msra.mxu0 0.0
      %352 = vmatprep.subr.mxu0 0.0
      %353 = vmatpush1.msra.mxu0 0.0
      %354 = vmatprep.subr.mxu0 0.0
      %355 = vmatpush1.msra.mxu0 0.0
      %356 = vmatprep.subr.mxu0 0.0
      %357 = vmatpush1.msra.mxu0 0.0
      %358 = vmatprep.subr.mxu0 0.0
      %359 = vmatpush1.msra.mxu0 0.0
      %360 = vmatprep.subr.mxu0 0.0
      %361 = vmatpush1.msra.mxu0 0.0
      %362 = vmatprep.subr.mxu0 0.0
      %363 = vmatpush1.msra.mxu0 0.0
      %364 = vmatprep.subr.mxu0 0.0
      %365 = vmatpush1.msra.mxu0 0.0
      %366 = vmatprep.subr.mxu0 0.0
      %367 = vmatpush1.msra.mxu0 0.0
      %368 = vmatprep.subr.mxu0 0.0
      %369 = vmatpush1.msra.mxu0 0.0
      %370 = vmatprep.subr.mxu0 0.0
      %371 = vmatpush1.msra.mxu0 0.0
      %372 = vmatprep.subr.mxu0 0.0
      %373 = vmatpush1.msra.mxu0 0.0
      %374 = vmatprep.subr.mxu0 0.0
      %375 = vmatpush1.msra.mxu0 0.0
      %376 = vmatprep.subr.mxu0 0.0
      %377 = vmatpush1.msra.mxu0 0.0
      %378 = vmatprep.subr.mxu0 0.0
      %379 = vmatpush1.msra.mxu0 0.0
      %380 = vmatprep.subr.mxu0 0.0
      %381 = vmatpush1.msra.mxu0 0.0
      %382 = vmatprep.subr.mxu0 0.0
      %383 = vmatpush1.msra.mxu0 0.0
      %384 = vmatprep.subr.mxu0 0.0
      %385 = vmatpush1.msra.mxu0 0.0
      %386 = vmatprep.subr.mxu0 0.0
      %387 = vmatpush1.msra.mxu0 0.0
      %388 = vmatprep.subr.mxu0 0.0
      %389 = vmatpush1.msra.mxu0 0.0
      %390 = vmatprep.mubr.f32.mxu0 0.0
      %391 = vmatmul.mubr.f32.gmra.mrb[0].mxu0 %v324
      %v392 = vpop.f32.mrb[0].mxu0
      %v393 = vadd.f32 %v320, %v392
      %v394 = vpop.f32.mrb[0].mxu0
      %v395 = vadd.f32 %v320, %v394
      %396 = vdwg.mxu0
      %v397 = vld [vmem:[%s300] sm:$0xff]
      %v398 = vld [vmem:[%s300 + $0x8] sm:$0xff]
      %vm399 = vcmask 64512
      %v401 = vsel %vm399, %v397, 0
      %v404 = vsel %vm399, %v398, 0
      %406 = vmatprep.subr.mxu0 %v395
      %407 = vmatpush1.msra.mxu0 %v393
      %408 = vmatprep.subr.mxu0 0.0
      %409 = vmatpush1.msra.mxu0 0.0
      %410 = vmatprep.subr.mxu0 0.0
      %411 = vmatpush1.msra.mxu0 0.0
      %412 = vmatprep.subr.mxu0 0.0
      %413 = vmatpush1.msra.mxu0 0.0
      %414 = vmatprep.subr.mxu0 0.0
      %415 = vmatpush1.msra.mxu0 0.0
      %416 = vmatprep.subr.mxu0 0.0
      %417 = vmatpush1.msra.mxu0 0.0
      %418 = vmatprep.subr.mxu0 0.0
      %419 = vmatpush1.msra.mxu0 0.0
      %420 = vmatprep.subr.mxu0 0.0
      %421 = vmatpush1.msra.mxu0 0.0
      %422 = vmatprep.subr.mxu0 0.0
      %423 = vmatpush1.msra.mxu0 0.0
      %424 = vmatprep.subr.mxu0 0.0
      %425 = vmatpush1.msra.mxu0 0.0
      %426 = vmatprep.subr.mxu0 0.0
      %427 = vmatpush1.msra.mxu0 0.0
      %428 = vmatprep.subr.mxu0 0.0
      %429 = vmatpush1.msra.mxu0 0.0
      %430 = vmatprep.subr.mxu0 0.0
      %431 = vmatpush1.msra.mxu0 0.0
      %432 = vmatprep.subr.mxu0 0.0
      %433 = vmatpush1.msra.mxu0 0.0
      %434 = vmatprep.subr.mxu0 0.0
      %435 = vmatpush1.msra.mxu0 0.0
      %436 = vmatprep.subr.mxu0 0.0
      %437 = vmatpush1.msra.mxu0 0.0
      %438 = vmatprep.subr.mxu0 0.0
      %439 = vmatpush1.msra.mxu0 0.0
      %440 = vmatprep.subr.mxu0 0.0
      %441 = vmatpush1.msra.mxu0 0.0
      %442 = vmatprep.subr.mxu0 0.0
      %443 = vmatpush1.msra.mxu0 0.0
      %444 = vmatprep.subr.mxu0 0.0
      %445 = vmatpush1.msra.mxu0 0.0
      %446 = vmatprep.subr.mxu0 0.0
      %447 = vmatpush1.msra.mxu0 0.0
      %448 = vmatprep.subr.mxu0 0.0
      %449 = vmatpush1.msra.mxu0 0.0
      %450 = vmatprep.subr.mxu0 0.0
      %451 = vmatpush1.msra.mxu0 0.0
      %452 = vmatprep.subr.mxu0 0.0
      %453 = vmatpush1.msra.mxu0 0.0
      %454 = vmatprep.subr.mxu0 0.0
      %455 = vmatpush1.msra.mxu0 0.0
      %456 = vmatprep.subr.mxu0 0.0
      %457 = vmatpush1.msra.mxu0 0.0
      %458 = vmatprep.subr.mxu0 0.0
      %459 = vmatpush1.msra.mxu0 0.0
      %460 = vmatprep.subr.mxu0 0.0
      %461 = vmatpush1.msra.mxu0 0.0
      %462 = vmatprep.subr.mxu0 0.0
      %463 = vmatpush1.msra.mxu0 0.0
      %464 = vmatprep.subr.mxu0 0.0
      %465 = vmatpush1.msra.mxu0 0.0
      %466 = vmatprep.subr.mxu0 0.0
      %467 = vmatpush1.msra.mxu0 0.0
      %468 = vmatprep.subr.mxu0 0.0
      %469 = vmatpush1.msra.mxu0 0.0
      %470 = vmatprep.mubr.f32.mxu0 0.0
      %471 = vmatmul.mubr.f32.gmra.mrb[0].mxu0 %v401
      %v472 = vpop.f32.mrb[0].mxu0
      %v473 = vadd.f32 0.0, %v472
      %v474 = vpop.f32.mrb[0].mxu0
      %v475 = vadd.f32 0.0, %v474
      %476 = vmatprep.mubr.f32.mxu0 0.0
      %477 = vmatmul.mubr.f32.gmra.mrb[0].mxu0 %v404
      %v478 = vpop.f32.mrb[0].mxu0
      %v479 = vadd.f32 0.0, %v478
      %v480 = vpop.f32.mrb[0].mxu0
      %v481 = vadd.f32 0.0, %v480
      %482 = vdwg.mxu0
      %v483 = vld [vmem:[%s4] sm:$0xff]
      %v484 = vld [vmem:[%s4 + $0x8] sm:$0xff]
      %486 = vset.pattern.permute.xlu0 0
      %487 = vperm.xlu0 %486, %v483
      %v488 = vpop.permute.xlu0 %487
      %491 = vset.pattern.permute.xlu0 0
      %492 = vperm.xlu0 %491, %v484
      %v493 = vpop.permute.xlu0 %492
      %v495 = vmul.f32 %v473, %v488
      %v496 = vmul.f32 %v475, %v488
      %v497 = vmul.f32 %v479, %v493
      %v498 = vmul.f32 %v481, %v493
      %v499 = vadd.f32 %v311, %v495
      %v500 = vadd.f32 %v312, %v496
      %v501 = vadd.f32 %v313, %v497
      %v502 = vadd.f32 %v314, %v498
      %v503 = vld [vmem:[%s5] sm:$0xff]
      %v504 = vld [vmem:[%s5 + $0x8] sm:$0xff]
      %506 = vset.pattern.permute.xlu0 0
      %507 = vperm.xlu0 %506, %v503
      %v508 = vpop.permute.xlu0 %507
      %511 = vset.pattern.permute.xlu0 0
      %512 = vperm.xlu0 %511, %v504
      %v513 = vpop.permute.xlu0 %512
      %v515 = vadd.f32 %v499, %v508
      %v516 = vadd.f32 %v500, %v508
      %v517 = vadd.f32 %v501, %v513
      %v518 = vadd.f32 %v502, %v513
      %519 = vst [vmem:[%s309] sm:$0xff] %v515
      %520 = vst [vmem:[%s309 + $0x8] sm:$0xff] %v516
      %521 = vst [vmem:[%s309 + $0x10] sm:$0xff] %v517
      %522 = vst [vmem:[%s309 + $0x18] sm:$0xff] %v518
      %s523 = smul.u32 2, %s22
      %p524 = scmp.lt.s32.totalorder %s21, 1
      %s525 = scalar_select %p524, %s21, 1
      %p526 = scmp.lt.s32.totalorder %s523, 1
      %s527 = scalar_select %p526, %s523, 1
      %s528 = smul.addr %s525, 4
      %s529 = sadd.s32 %s527, %s528
      %s530 = smul.addr %s529, 8
      %s531 = scalar_lea.vmem %s6, %s530
      // Predicated region
      $region45: #{glore_unit_pallas.3} parent=43 // pred_check
        %p532 = pneg %p187
      $region46: #{glore_unit_pallas.3} parent=43 // pred_check_branch
        %534 = sbr.rel (%p532) target = $region48
      $region47: #{glore_unit_pallas.3} parent=43 // pred_region
        %s535 = smul.u32 2, %s22
      $region48: #{glore_unit_pallas.3} parent=43 // pred_fallthru
        _
    $region44: #{glore_unit_pallas.3} parent=5 // pred_fallthru
      _
    %p536 = scmp.le.s32.totalorder 2, %s12
    // Predicated region
    $region49: #{glore_unit_pallas.3} parent=5 // pred_check
      %p537 = pneg %p536
    $region50: #{glore_unit_pallas.3} parent=5 // pred_check_branch
      %539 = sbr.rel (%p537) target = $region52
    $region51: #{glore_unit_pallas.3} parent=5 // pred_region
      %s540 = ssub.s32 %s12, 2
      // Predicated region
      $region53: #{glore_unit_pallas.3} parent=51 // pred_check
        %p541 = pneg %p193
      $region54: #{glore_unit_pallas.3} parent=51 // pred_check_branch
        %543 = sbr.rel (%p541) target = $region56
      $region55: #{glore_unit_pallas.3} parent=51 // pred_region
        %s544 = smul.u32 2, %s24
        %p545 = scmp.lt.s32.totalorder %s23, 1
        %s546 = scalar_select %p545, %s23, 1
        %p547 = scmp.lt.s32.totalorder %s544, 1
        %s548 = scalar_select %p547, %s544, 1
        %s549 = smul.addr %s546, 4
        %s550 = sadd.s32 %s548, %s549
        %s551 = smul.addr %s550, 8
        %s552 = scalar_lea.vmem %s6, %s551
      $region56: #{glore_unit_pallas.3} parent=51 // pred_fallthru
        _
    $region52: #{glore_unit_pallas.3} parent=5 // pred_fallthru
      _
  $region6: #{glore_unit_pallas.3} parent=0 // loop_footer
    %s16 = sadd.s32 1, %s12
  $region7: #{glore_unit_pallas.3} parent=0 // loop_footer_branch
    %11 = sbr.rel target = $region3
  $region8: #{glore_unit_pallas.3} parent=0 // loop_exit
    _

</llo_original>
